<compile_context>
chip_gen: v6e
topology: v6e:2x2x1
jax: 0.10.0
libtpu: 0.0.40
codegen_flags: <defaults>
</compile_context>

<pallas_src>
import jax
import jax.numpy as jnp
from jax.experimental import pallas as pl
from jax.experimental.pallas import tpu as pltpu


def _round_up(a, b):
    return (a + b - 1) // b * b


def _deepstream_output_kernel(x_ref, o_ref):
    # x_ref: (1, C, TN) with C = 4 + num_classes
    # o_ref: (1, 6, TN) rows = [x1, y1, x2, y2, score, label]
    C = x_ref.shape[1]
    TN = x_ref.shape[2]
    out_dtype = o_ref.dtype

    NEG = jnp.float32(-3.0e38)   # "minus infinity" sentinel (finite, avoids -inf==-inf ties)
    BIG = jnp.int32(2 ** 30)

    best_v = jnp.full((1, TN), NEG, dtype=jnp.float32)
    best_i = jnp.full((1, TN), BIG, dtype=jnp.int32)

    # Fused single-pass max/argmax over sublane-aligned 8-row groups (no offset-4 slice,
    # no nc x TN int32 intermediates).  Static Python loop: C is small and static, carries
    # are two (1, TN) vregs.
    head = None
    for g0 in range(0, C, 8):
        g1 = min(g0 + 8, C)
        blk = x_ref[0, g0:g1, :]                       # sublane-aligned read, (<=8, TN)
        if g0 == 0:
            head = blk                                  # reuse rows 0..3 for the box math
        v = blk.astype(jnp.float32)
        rows = jax.lax.broadcasted_iota(jnp.int32, v.shape, 0) + g0
        if g0 < 4:
            v = jnp.where(rows >= 4, v, NEG)            # mask out the 4 box rows
        gmax = jnp.max(v, axis=0, keepdims=True)        # (1, TN)
        garg = jnp.min(jnp.where(v == gmax, rows, BIG), axis=0, keepdims=True)
        take = gmax > best_v                            # strict '>' => first-index ties (torch)
        best_i = jnp.where(take, garg, best_i)
        best_v = jnp.maximum(best_v, gmax)

    # Box math: (cx, cy, w, h) -> (cx - w/2, cy - h/2, cx + w/2, cy + h/2)
    xy = head[0:2, :]                                   # (2, TN)
    wh = head[2:4, :]                                   # (2, TN)
    half = wh * jnp.asarray(0.5, dtype=wh.dtype)

    # Labels cast to the output float dtype (exact for f32; for bf16 only exact for
    # num_classes <= 256).  NaN class scores: tie test never matches, label falls back to
    # another group / BIG (reference argmax would return the NaN index) -- edge case only.
    labels = (best_i - 4).astype(out_dtype)

    out6 = jnp.concatenate(
        [xy - half, xy + half, best_v.astype(out_dtype), labels], axis=0)   # (6, TN)
    o_ref[0, :, :] = out6                               # single fused store per step


def _pick_tile_n(N, C, itemsize, tile_n):
    """Anchor-axis tile: multiple of 128 lanes, capped by request, N, and a VMEM budget."""
    n128 = _round_up(N, 128)
    TN = min(_round_up(max(tile_n, 128), 128), n128)
    # Per-step working set: double-buffered (C+6)-row in/out tiles + ~16 x TN x 4B of
    # f32/i32 intermediates.  Keep it ~6 MiB so it fits easily under the v7x 32 MiB
    # scoped default (and leaves megacore headroom).
    budget = 6 << 20
    per_lane = 2 * (C + 6) * itemsize + 16 * 4
    max_tn = max(128, (budget // per_lane) // 128 * 128)
    return max(128, min(TN, max_tn))


def deepstream_output(x, *, tile_n=1024, channel_major_output=False):
    """x: (B, 4+num_classes, N) float array (same NCL input as the PyTorch module).

    Returns (B, N, 6) = [x1, y1, x2, y2, score, label] matching the PyTorch module,
    or (B, 6, N) lane-dense if channel_major_output=True (lets a fused consumer skip
    the layout transpose).
    """
    B, C, N = x.shape
    assert C >= 5, "need at least one class channel"
    itemsize = jnp.dtype(x.dtype).itemsize

    TN = _pick_tile_n(N, C, itemsize, tile_n)
    grid = (B, pl.cdiv(N, TN))       # ragged last block: no input pad, no output slice

    num_classes = C - 4
    cost = pl.CostEstimate(
        flops=int(B * N * (6 + 5 * num_classes)),
        transcendentals=0,
        bytes_accessed=int(B * N * (C + 6) * itemsize),
    )

    out_cn = pl.pallas_call(
        _deepstream_output_kernel,
        out_shape=jax.ShapeDtypeStruct((B, 6, N), x.dtype),
        grid=grid,
        in_specs=[pl.BlockSpec((1, C, TN), lambda b, n: (b, 0, n))],
        out_specs=pl.BlockSpec((1, 6, TN), lambda b, n: (b, 0, n)),
        compiler_params=pltpu.CompilerParams(
            dimension_semantics=("parallel", "parallel")),
        cost_estimate=cost,
    )(x)

    if channel_major_output:
        return out_cn
    # Match PyTorch output layout (B, N, 6).  Glue-only; skip via channel_major_output.
    return jnp.transpose(out_cn, (0, 2, 1))


def _reference(x):
    xt = jnp.transpose(x, (0, 2, 1))
    boxes = xt[:, :, :4]
    M = jnp.array([[1, 0, 1, 0], [0, 1, 0, 1],
                   [-0.5, 0, 0.5, 0], [0, -0.5, 0, 0.5]], dtype=boxes.dtype)
    boxes = boxes @ M
    cls = xt[:, :, 4:]
    scores = jnp.max(cls, axis=-1, keepdims=True)
    labels = jnp.argmax(cls, axis=-1, keepdims=True).astype(boxes.dtype)
    return jnp.concatenate([boxes, scores, labels], axis=-1)


if __name__ == "__main__":
    key = jax.random.PRNGKey(0)

    # Case 1: N not a multiple of 128 -> exercises the ragged (partial) edge block,
    # with no wrapper-side padding.
    B, num_classes, N = 2, 16, 200
    C = 4 + num_classes
    k1, k2 = jax.random.split(key)
    x1 = jax.random.uniform(k1, (B, C, N), dtype=jnp.float32,
                            minval=0.0, maxval=10.0)
    out1 = jax.block_until_ready(deepstream_output(x1))
    ref1 = _reference(x1)
    assert out1.shape == (B, N, 6)
    assert jnp.allclose(out1, ref1, atol=1e-5, rtol=1e-5)

    # Lane-dense (channel-major) output path is consistent with the default path.
    out1_cn = jax.block_until_ready(deepstream_output(x1, channel_major_output=True))
    assert out1_cn.shape == (B, 6, N)
    assert jnp.allclose(jnp.transpose(out1_cn, (0, 2, 1)), ref1, atol=1e-5, rtol=1e-5)

    # Case 2: several anchor tiles (small tile_n to force a multi-step 2-D grid).
    B2, N2 = 2, 512
    x2 = jax.random.uniform(k2, (B2, C, N2), dtype=jnp.float32,
                            minval=0.0, maxval=10.0)
    out2 = jax.block_until_ready(deepstream_output(x2, tile_n=128))
    ref2 = _reference(x2)
    assert out2.shape == (B2, N2, 6)
    assert jnp.allclose(out2, ref2, atol=1e-5, rtol=1e-5)

    print("KERNEL_OK")
</pallas_src>

<mosaic_0001>
module attributes {stable_mosaic.version = 11 : i64} {
  func.func @_deepstream_output_kernel(%arg0: i32, %arg1: i32, %arg2: memref<1x20x256xf32, #tpu.memory_space<vmem>>, %arg3: memref<1x6x256xf32, #tpu.memory_space<vmem>>) attributes {dimension_semantics = [#tpu.dimension_semantics<parallel>, #tpu.dimension_semantics<parallel>], iteration_bounds = array<i64: 2, 1>, scalar_prefetch = 0 : i64, scratch_operands = 0 : i64, tpu.core_type = #tpu.core_type<tc>, window_params = [{transform_indices = @transform_0, window_bounds = array<i64: 1, 20, 256>}, {transform_indices = @transform_1, window_bounds = array<i64: 1, 6, 256>}]} {
    %cst = arith.constant -3.000000e+38 : f32
    %0 = vector.broadcast %cst : f32 to vector<1x256xf32>
    %c1073741824_i32 = arith.constant 1073741824 : i32
    %1 = vector.broadcast %c1073741824_i32 : i32 to vector<1x256xi32>
    %c0 = arith.constant 0 : index
    %c0_0 = arith.constant 0 : index
    %c0_1 = arith.constant 0 : index
    %2 = vector.load %arg2[%c0, %c0_0, %c0_1] : memref<1x20x256xf32, #tpu.memory_space<vmem>>, vector<1x8x256xf32>
    %3 = vector.shape_cast %2 : vector<1x8x256xf32> to vector<8x256xf32>
    %4 = tpu.iota {dimensions = array<i32: 0>} : vector<8x256xi32>
    %c0_i32 = arith.constant 0 : i32
    %5 = vector.broadcast %c0_i32 : i32 to vector<8x256xi32>
    %6 = arith.addi %4, %5 : vector<8x256xi32>
    %c4_i32 = arith.constant 4 : i32
    %7 = vector.broadcast %c4_i32 : i32 to vector<8x256xi32>
    %8 = arith.cmpi sge, %6, %7 : vector<8x256xi32>
    %cst_2 = arith.constant -3.000000e+38 : f32
    %9 = vector.broadcast %cst_2 : f32 to vector<8x256xf32>
    %10 = arith.select %8, %3, %9 : vector<8x256xi1>, vector<8x256xf32>
    %cst_3 = arith.constant dense<0xFF800000> : vector<256xf32>
    %11 = vector.multi_reduction <maximumf>, %10, %cst_3 [0] : vector<8x256xf32> to vector<256xf32>
    %12 = vector.shape_cast %11 : vector<256xf32> to vector<1x256xf32>
    %13 = vector.broadcast %12 : vector<1x256xf32> to vector<8x256xf32>
    %14 = arith.cmpf oeq, %10, %13 : vector<8x256xf32>
    %c1073741824_i32_4 = arith.constant 1073741824 : i32
    %15 = vector.broadcast %c1073741824_i32_4 : i32 to vector<8x256xi32>
    %16 = arith.select %14, %6, %15 : vector<8x256xi1>, vector<8x256xi32>
    %cst_5 = arith.constant dense<2147483647> : vector<256xi32>
    %17 = vector.multi_reduction <minsi>, %16, %cst_5 [0] : vector<8x256xi32> to vector<256xi32>
    %18 = vector.shape_cast %17 : vector<256xi32> to vector<1x256xi32>
    %19 = arith.cmpf ogt, %12, %0 : vector<1x256xf32>
    %20 = arith.select %19, %18, %1 : vector<1x256xi1>, vector<1x256xi32>
    %21 = arith.maximumf %0, %12 : vector<1x256xf32>
    %c0_6 = arith.constant 0 : index
    %c8 = arith.constant 8 : index
    %c0_7 = arith.constant 0 : index
    %22 = vector.load %arg2[%c0_6, %c8, %c0_7] : memref<1x20x256xf32, #tpu.memory_space<vmem>>, vector<1x8x256xf32>
    %23 = vector.shape_cast %22 : vector<1x8x256xf32> to vector<8x256xf32>
    %24 = tpu.iota {dimensions = array<i32: 0>} : vector<8x256xi32>
    %c8_i32 = arith.constant 8 : i32
    %25 = vector.broadcast %c8_i32 : i32 to vector<8x256xi32>
    %26 = arith.addi %24, %25 : vector<8x256xi32>
    %cst_8 = arith.constant dense<0xFF800000> : vector<256xf32>
    %27 = vector.multi_reduction <maximumf>, %23, %cst_8 [0] : vector<8x256xf32> to vector<256xf32>
    %28 = vector.shape_cast %27 : vector<256xf32> to vector<1x256xf32>
    %29 = vector.broadcast %28 : vector<1x256xf32> to vector<8x256xf32>
    %30 = arith.cmpf oeq, %23, %29 : vector<8x256xf32>
    %c1073741824_i32_9 = arith.constant 1073741824 : i32
    %31 = vector.broadcast %c1073741824_i32_9 : i32 to vector<8x256xi32>
    %32 = arith.select %30, %26, %31 : vector<8x256xi1>, vector<8x256xi32>
    %cst_10 = arith.constant dense<2147483647> : vector<256xi32>
    %33 = vector.multi_reduction <minsi>, %32, %cst_10 [0] : vector<8x256xi32> to vector<256xi32>
    %34 = vector.shape_cast %33 : vector<256xi32> to vector<1x256xi32>
    %35 = arith.cmpf ogt, %28, %21 : vector<1x256xf32>
    %36 = arith.select %35, %34, %20 : vector<1x256xi1>, vector<1x256xi32>
    %37 = arith.maximumf %21, %28 : vector<1x256xf32>
    %c0_11 = arith.constant 0 : index
    %c16 = arith.constant 16 : index
    %c0_12 = arith.constant 0 : index
    %38 = vector.load %arg2[%c0_11, %c16, %c0_12] : memref<1x20x256xf32, #tpu.memory_space<vmem>>, vector<1x4x256xf32>
    %39 = vector.shape_cast %38 : vector<1x4x256xf32> to vector<4x256xf32>
    %40 = tpu.iota {dimensions = array<i32: 0>} : vector<4x256xi32>
    %c16_i32 = arith.constant 16 : i32
    %41 = vector.broadcast %c16_i32 : i32 to vector<4x256xi32>
    %42 = arith.addi %40, %41 : vector<4x256xi32>
    %cst_13 = arith.constant dense<0xFF800000> : vector<256xf32>
    %43 = vector.multi_reduction <maximumf>, %39, %cst_13 [0] : vector<4x256xf32> to vector<256xf32>
    %44 = vector.shape_cast %43 : vector<256xf32> to vector<1x256xf32>
    %45 = vector.broadcast %44 : vector<1x256xf32> to vector<4x256xf32>
    %46 = arith.cmpf oeq, %39, %45 : vector<4x256xf32>
    %c1073741824_i32_14 = arith.constant 1073741824 : i32
    %47 = vector.broadcast %c1073741824_i32_14 : i32 to vector<4x256xi32>
    %48 = arith.select %46, %42, %47 : vector<4x256xi1>, vector<4x256xi32>
    %cst_15 = arith.constant dense<2147483647> : vector<256xi32>
    %49 = vector.multi_reduction <minsi>, %48, %cst_15 [0] : vector<4x256xi32> to vector<256xi32>
    %50 = vector.shape_cast %49 : vector<256xi32> to vector<1x256xi32>
    %51 = arith.cmpf ogt, %44, %37 : vector<1x256xf32>
    %52 = arith.select %51, %50, %36 : vector<1x256xi1>, vector<1x256xi32>
    %53 = arith.maximumf %37, %44 : vector<1x256xf32>
    %54 = vector.extract_strided_slice %3 {offsets = [0, 0], sizes = [2, 256], strides = [1, 1]} : vector<8x256xf32> to vector<2x256xf32>
    %55 = vector.extract_strided_slice %3 {offsets = [2, 0], sizes = [2, 256], strides = [1, 1]} : vector<8x256xf32> to vector<2x256xf32>
    %cst_16 = arith.constant 5.000000e-01 : f32
    %56 = vector.broadcast %cst_16 : f32 to vector<2x256xf32>
    %57 = arith.mulf %55, %56 : vector<2x256xf32>
    %c4_i32_17 = arith.constant 4 : i32
    %58 = vector.broadcast %c4_i32_17 : i32 to vector<1x256xi32>
    %59 = arith.subi %52, %58 : vector<1x256xi32>
    %60 = arith.sitofp %59 : vector<1x256xi32> to vector<1x256xf32>
    %61 = arith.subf %54, %57 : vector<2x256xf32>
    %62 = arith.addf %54, %57 : vector<2x256xf32>
    %63 = tpu.concatenate %61, %62, %53, %60 in 0 : vector<2x256xf32>, vector<2x256xf32>, vector<1x256xf32>, vector<1x256xf32> -> vector<6x256xf32>
    %c0_18 = arith.constant 0 : index
    %c0_19 = arith.constant 0 : index
    %c0_20 = arith.constant 0 : index
    %64 = vector.load %arg3[%c0_18, %c0_19, %c0_20] : memref<1x6x256xf32, #tpu.memory_space<vmem>>, vector<1x6x256xf32>
    %65 = vector.shape_cast %64 : vector<1x6x256xf32> to vector<6x256xf32>
    %66 = vector.shape_cast %63 : vector<6x256xf32> to vector<1x6x256xf32>
    tpu.vector_store %arg3[%c0_18, %c0_19, %c0_20], %66 {strides = array<i32>} : memref<1x6x256xf32, #tpu.memory_space<vmem>>, vector<1x6x256xf32>,
    return
  }
  func.func @transform_0(%arg0: i32, %arg1: i32) -> (i32, i32, i32) {
    %c0_i32 = arith.constant 0 : i32
    %c0_i32_0 = arith.constant 0 : i32
    return %arg0, %c0_i32, %arg1 : i32, i32, i32
  }
  func.func @transform_1(%arg0: i32, %arg1: i32) -> (i32, i32, i32) {
    %c0_i32 = arith.constant 0 : i32
    %c0_i32_0 = arith.constant 0 : i32
    return %arg0, %c0_i32, %arg1 : i32, i32, i32
  }
}

</mosaic_0001>

<llo_original>
// kernel: tpu_custom_call.1
$region0: #{tpu_custom_call.1}
  #allocation0 [shape = 'u32[]', space=smem, size = 0x4, offset = 0x4, fixed_abs, tag = 'smem constant byte address 0x4 - core index']
  #allocation1 [shape = 'u32[144,128]{1,0:T(1,128)}', space=vmem, size = 0x12000, scoped, tag = 'internal scratch']
  %s0 = inlined_call_operand.vmem [shape: f32[2,20,200], index: 0, kind: input, shape index: {}]
  %s1 = inlined_call_operand.vmem [shape: f32[2,6,200], index: 1, kind: output, shape index: {}]
  %s2 = sld [smem:[#allocation0]]
  $region37: #{tpu_custom_call.1} parent=0
    _
  %s4 = ssub.s32 1, %s2
  %s5 = scalar_select 0, %s4, %s2
  loop: start=0, step=1, limit=4
  $region2: #{tpu_custom_call.1} parent=0 // loop_pre_header
    _
  $region3: #{tpu_custom_call.1} parent=0 // loop_header
    %s7 = sphi 0, %s11
    %p8 = scmp.ge.s32.totalorder %s7, 4
    %s14 = sphi 0, %s26
    %s15 = sphi 0, %s22
    %s16 = sphi 0, %s14
    %s17 = sphi 0, %s15
    %s18 = sphi 0, %s16
    %s19 = sphi 0, %s17
    %s31 = sphi 0, %s33
    %s34 = sphi 0, %s31
    %s35 = sphi 0, %s34
    %s51 = sphi 0, %s35
    %s59 = sphi 0, %s61
    %s62 = sphi 0, %s59
    %s63 = sphi 0, %s62
    %s79 = sphi 0, %s63
  $region4: #{tpu_custom_call.1} parent=0 // loop_header_branch
    %10 = sbr.rel (%p8) target = $region8
  $region5: #{tpu_custom_call.1} parent=0 // loop_body
    %s12 = ssub.s32 %s7, 1
    %s13 = ssub.s32 %s7, 2
    %s20 = sadd.s32 1, %s15
    %p21 = scmp.ge.s32.totalorder %s20, 1
    %s22 = scalar_select %p21, 0, %s20
    %s23 = sadd.s32 1, %s14
    %s24 = scalar_select %p21, %s23, %s14
    %p25 = scmp.ge.s32.totalorder %s24, 2
    %s26 = scalar_select %p25, 0, %s24
    %s27 = ssub.s32 %s14, %s26
    %s28 = ssub.s32 %s15, %s22
    %s29 = sor.u32 %s27, %s28
    %p30 = scmp.eq.s32.totalorder %s29, 0
    %s32 = sadd.s32 %s31, 1
    %s33 = scalar_select %p30, %s31, %s32
    %p36 = pneg %p30
    %p37 = scmp.eq.s32.totalorder %s7, 1
    %p38 = por %p36, %p37
    %p39 = scmp.ne.s32.totalorder %s31, %s34
    %p40 = scmp.eq.s32.totalorder %s7, 0
    %p41 = por %p39, %p40
    %p42 = scmp.ne.s32.totalorder %s31, %s34
    %p43 = scmp.eq.s32.totalorder %s12, 1
    %p44 = por %p42, %p43
    %p45 = scmp.ne.s32.totalorder %s34, %s35
    %p46 = scmp.eq.s32.totalorder %s12, 0
    %p47 = por %p45, %p46
    %p48 = scmp.ne.s32.totalorder %s34, %s35
    %p49 = scmp.eq.s32.totalorder %s13, 1
    %p50 = por %p48, %p49
    %p52 = scmp.ne.s32.totalorder %s35, %s51
    %p53 = scmp.eq.s32.totalorder %s13, 0
    %p54 = por %p52, %p53
    %s55 = ssub.s32 %s14, %s26
    %s56 = ssub.s32 %s15, %s22
    %s57 = sor.u32 %s55, %s56
    %p58 = scmp.eq.s32.totalorder %s57, 0
    %s60 = sadd.s32 %s59, 1
    %s61 = scalar_select %p58, %s59, %s60
    %p64 = pneg %p58
    %p65 = scmp.eq.s32.totalorder %s7, 1
    %p66 = por %p64, %p65
    %p67 = scmp.ne.s32.totalorder %s59, %s62
    %p68 = scmp.eq.s32.totalorder %s7, 0
    %p69 = por %p67, %p68
    %p70 = scmp.ne.s32.totalorder %s59, %s62
    %p71 = scmp.eq.s32.totalorder %s12, 1
    %p72 = por %p70, %p71
    %p73 = scmp.ne.s32.totalorder %s62, %s63
    %p74 = scmp.eq.s32.totalorder %s12, 0
    %p75 = por %p73, %p74
    %p76 = scmp.ne.s32.totalorder %s62, %s63
    %p77 = scmp.eq.s32.totalorder %s13, 1
    %p78 = por %p76, %p77
    %p80 = scmp.ne.s32.totalorder %s63, %s79
    %p81 = scmp.eq.s32.totalorder %s13, 0
    %p82 = por %p80, %p81
    %p83 = scmp.le.s32.totalorder 1, %s7
    %p84 = scmp.lt.s32.totalorder %s7, 3
    %p85 = pnand %p83, %p84
    %p86 = pneg %p85
    // Predicated region
    $region9: #{tpu_custom_call.1} parent=5 // pred_check
      _
    $region10: #{tpu_custom_call.1} parent=5 // pred_check_branch
      %88 = sbr.rel (%p85) target = $region12
    $region11: #{tpu_custom_call.1} parent=5 // pred_region
      %s89 = ssub.s32 %s7, 1
    $region12: #{tpu_custom_call.1} parent=5 // pred_fallthru
      _
    %p90 = scmp.lt.s32.totalorder %s7, 2
    // Predicated region
    $region13: #{tpu_custom_call.1} parent=5 // pred_check
      %p91 = pneg %p90
    $region14: #{tpu_custom_call.1} parent=5 // pred_check_branch
      %93 = sbr.rel (%p91) target = $region16
    $region15: #{tpu_custom_call.1} parent=5 // pred_region
      // Predicated region
      $region17: #{tpu_custom_call.1} parent=15 // pred_check
        %p94 = pneg %p41
      $region18: #{tpu_custom_call.1} parent=15 // pred_check_branch
        %96 = sbr.rel (%p94) target = $region20
      $region19: #{tpu_custom_call.1} parent=15 // pred_region
        %s97 = smul.u32 2, %s15
        %p98 = scmp.lt.s32.totalorder %s14, 1
        %s99 = scalar_select %p98, %s14, 1
        %p100 = scmp.lt.s32.totalorder %s97, 1
        %s101 = scalar_select %p100, %s97, 1
        %s102 = smul.addr %s99, 6
        %s103 = sadd.s32 %s101, %s102
        %s104 = smul.addr %s103, 8
        %s105 = scalar_lea.vmem %s0, %s104
        %s106 = smul.u32 2, %s15
      $region20: #{tpu_custom_call.1} parent=15 // pred_fallthru
        _
    $region16: #{tpu_custom_call.1} parent=5 // pred_fallthru
      _
    %p107 = scmp.le.s32.totalorder 1, %s7
    %p108 = scmp.lt.s32.totalorder %s7, 3
    %p109 = pnand %p107, %p108
    %p110 = pneg %p109
    // Predicated region
    $region21: #{tpu_custom_call.1} parent=5 // pred_check
      _
    $region22: #{tpu_custom_call.1} parent=5 // pred_check_branch
      %112 = sbr.rel (%p109) target = $region24
    $region23: #{tpu_custom_call.1} parent=5 // pred_region
      %s113 = ssub.s32 %s7, 1
      %s114 = smul.u32 2, %s17
      %p115 = scmp.lt.s32.totalorder %s16, 1
      %s116 = scalar_select %p115, %s16, 1
      %p117 = scmp.lt.s32.totalorder %s114, 1
      %s118 = scalar_select %p117, %s114, 1
      %s119 = smul.addr %s116, 6
      %s120 = sadd.s32 %s118, %s119
      %s121 = smul.addr %s120, 8
      %s122 = scalar_lea.vmem %s0, %s121
      %p123 = pneg %p47
      %p124 = pneg %p44
      %p125 = pneg %p75
      %p126 = pneg %p72
      %s127 = smul.u32 2, %s17
      %p128 = scmp.lt.s32.totalorder %s16, 1
      %s129 = scalar_select %p128, %s16, 1
      %p130 = scmp.lt.s32.totalorder %s127, 1
      %s131 = scalar_select %p130, %s127, 1
      %s132 = smul.addr %s129, 2
      %s133 = sadd.s32 %s131, %s132
      %s134 = smul.addr %s133, 8
      %s135 = scalar_lea.vmem %s1, %s134
      %s136 = smul.u32 2, %s17
      %p137 = scmp.lt.s32.totalorder %s16, 1
      %s138 = scalar_select %p137, %s16, 1
      %p139 = scmp.lt.s32.totalorder %s136, 1
      %s140 = scalar_select %p139, %s136, 1
      %s141 = smul.addr %s138, 6
      %s142 = sadd.s32 %s140, %s141
      %s143 = smul.addr %s142, 8
      %s144 = scalar_lea.vmem %s0, %s143
      %s145 = smul.u32 2, %s17
      %s146 = smul.u32 2, %s17
      %p147 = scmp.lt.s32.totalorder %s16, 1
      %s148 = scalar_select %p147, %s16, 1
      %p149 = scmp.lt.s32.totalorder %s146, 1
      %s150 = scalar_select %p149, %s146, 1
      %s151 = smul.addr %s148, 2
      %s152 = sadd.s32 %s150, %s151
      %s153 = smul.addr %s152, 8
      %s154 = scalar_lea.vmem %s1, %s153
      %s155 = smul.u32 2, %s17
      %v156 = vld [vmem:[%s144] sm:$0xff]
      %v157 = vld [vmem:[%s144 + $0x8] sm:$0xff]
      %v158 = vlaneseq
      %v159 = vshrl.u32 %v158, 7
      %vm160 = vcmp.ge.s32.totalorder %v159, 4
      %v161 = vsel %vm160, %v156, -3e+38
      %v162 = vsel %vm160, %v157, -3e+38
      %v163 = vrot.slane %v161, 4
      %v164 = vmax.f32 %v161, %v163
      %v165 = vrot.slane %v164, 2
      %v166 = vmax.f32 %v164, %v165
      %v167 = vrot.slane %v166, 1
      %v168 = vmax.f32 %v166, %v167
      %v169 = vrot.slane %v162, 4
      %v170 = vmax.f32 %v162, %v169
      %v171 = vrot.slane %v170, 2
      %v172 = vmax.f32 %v170, %v171
      %v173 = vrot.slane %v172, 1
      %v174 = vmax.f32 %v172, %v173
      %vm175 = vcmp.eq.f32.partialorder %v161, %v168
      %vm176 = vcmp.eq.f32.partialorder %v162, %v174
      %v177 = vsel %vm175, %v159, 1073741824
      %v178 = vsel %vm176, %v159, 1073741824
      %v179 = vrot.slane %v177, 4
      %vm180 = vcmp.lt.s32.totalorder %v177, %v179
      %v181 = vsel %vm180, %v177, %v179
      %v182 = vrot.slane %v181, 2
      %vm183 = vcmp.lt.s32.totalorder %v181, %v182
      %v184 = vsel %vm183, %v181, %v182
      %v185 = vrot.slane %v184, 1
      %vm186 = vcmp.lt.s32.totalorder %v184, %v185
      %v187 = vsel %vm186, %v184, %v185
      %v188 = vrot.slane %v178, 4
      %vm189 = vcmp.lt.s32.totalorder %v178, %v188
      %v190 = vsel %vm189, %v178, %v188
      %v191 = vrot.slane %v190, 2
      %vm192 = vcmp.lt.s32.totalorder %v190, %v191
      %v193 = vsel %vm192, %v190, %v191
      %v194 = vrot.slane %v193, 1
      %vm195 = vcmp.lt.s32.totalorder %v193, %v194
      %v196 = vsel %vm195, %v193, %v194
      %vm197 = vcmp.gt.f32.partialorder %v168, -3e+38
      %vm198 = vcmp.gt.f32.partialorder %v174, -3e+38
      %v199 = vsel %vm197, %v187, 1073741824
      %v200 = vsel %vm198, %v196, 1073741824
      %v201 = vmax.f32 %v168, -3e+38
      %v202 = vmax.f32 %v174, -3e+38
      %v203 = vld [vmem:[%s144 + $0x10] sm:$0xff]
      %v204 = vld [vmem:[%s144 + $0x18] sm:$0xff]
      %v205 = vadd.s32 %v159, 8
      %v206 = vrot.slane %v203, 4
      %v207 = vmax.f32 %v203, %v206
      %v208 = vrot.slane %v207, 2
      %v209 = vmax.f32 %v207, %v208
      %v210 = vrot.slane %v209, 1
      %v211 = vmax.f32 %v209, %v210
      %v212 = vrot.slane %v204, 4
      %v213 = vmax.f32 %v204, %v212
      %v214 = vrot.slane %v213, 2
      %v215 = vmax.f32 %v213, %v214
      %v216 = vrot.slane %v215, 1
      %v217 = vmax.f32 %v215, %v216
      %vm218 = vcmp.eq.f32.partialorder %v203, %v211
      %vm219 = vcmp.eq.f32.partialorder %v204, %v217
      %v220 = vsel %vm218, %v205, 1073741824
      %v221 = vsel %vm219, %v205, 1073741824
      %v222 = vrot.slane %v220, 4
      %vm223 = vcmp.lt.s32.totalorder %v220, %v222
      %v224 = vsel %vm223, %v220, %v222
      %v225 = vrot.slane %v224, 2
      %vm226 = vcmp.lt.s32.totalorder %v224, %v225
      %v227 = vsel %vm226, %v224, %v225
      %v228 = vrot.slane %v227, 1
      %vm229 = vcmp.lt.s32.totalorder %v227, %v228
      %v230 = vsel %vm229, %v227, %v228
      %v231 = vrot.slane %v221, 4
      %vm232 = vcmp.lt.s32.totalorder %v221, %v231
      %v233 = vsel %vm232, %v221, %v231
      %v234 = vrot.slane %v233, 2
      %vm235 = vcmp.lt.s32.totalorder %v233, %v234
      %v236 = vsel %vm235, %v233, %v234
      %v237 = vrot.slane %v236, 1
      %vm238 = vcmp.lt.s32.totalorder %v236, %v237
      %v239 = vsel %vm238, %v236, %v237
      %vm240 = vcmp.gt.f32.partialorder %v211, %v201
      %vm241 = vcmp.gt.f32.partialorder %v217, %v202
      %v242 = vsel %vm240, %v230, %v199
      %v243 = vsel %vm241, %v239, %v200
      %v244 = vmax.f32 %v201, %v211
      %v245 = vmax.f32 %v202, %v217
      %v246 = vld [vmem:[%s144 + $0x20] sm:$0xf]
      %v247 = vld [vmem:[%s144 + $0x28] sm:$0xf]
      %v248 = vadd.s32 %v159, 16
      %vm249 = vcmask 1043456
      %v250 = vsel %vm249, %v246, -inf
      %v251 = vrot.slane %v250, 4
      %v252 = vmax.f32 %v250, %v251
      %v253 = vrot.slane %v252, 2
      %v254 = vmax.f32 %v252, %v253
      %v255 = vrot.slane %v254, 1
      %v256 = vmax.f32 %v254, %v255
      %v257 = vsel %vm249, %v247, -inf
      %v258 = vrot.slane %v257, 4
      %v259 = vmax.f32 %v257, %v258
      %v260 = vrot.slane %v259, 2
      %v261 = vmax.f32 %v259, %v260
      %v262 = vrot.slane %v261, 1
      %v263 = vmax.f32 %v261, %v262
      %vm264 = vcmp.eq.f32.partialorder %v246, %v256
      %vm265 = vcmp.eq.f32.partialorder %v247, %v263
      %v266 = vsel %vm264, %v248, 1073741824
      %v267 = vsel %vm265, %v248, 1073741824
      %v268 = vsel %vm249, %v266, 2147483647
      %v269 = vrot.slane %v268, 4
      %vm270 = vcmp.lt.s32.totalorder %v268, %v269
      %v271 = vsel %vm270, %v268, %v269
      %v272 = vrot.slane %v271, 2
      %vm273 = vcmp.lt.s32.totalorder %v271, %v272
      %v274 = vsel %vm273, %v271, %v272
      %v275 = vrot.slane %v274, 1
      %vm276 = vcmp.lt.s32.totalorder %v274, %v275
      %v277 = vsel %vm276, %v274, %v275
      %v278 = vsel %vm249, %v267, 2147483647
      %v279 = vrot.slane %v278, 4
      %vm280 = vcmp.lt.s32.totalorder %v278, %v279
      %v281 = vsel %vm280, %v278, %v279
      %v282 = vrot.slane %v281, 2
      %vm283 = vcmp.lt.s32.totalorder %v281, %v282
      %v284 = vsel %vm283, %v281, %v282
      %v285 = vrot.slane %v284, 1
      %vm286 = vcmp.lt.s32.totalorder %v284, %v285
      %v287 = vsel %vm286, %v284, %v285
      %vm288 = vcmp.gt.f32.partialorder %v256, %v244
      %vm289 = vcmp.gt.f32.partialorder %v263, %v245
      %v290 = vsel %vm288, %v277, %v242
      %v291 = vsel %vm289, %v287, %v243
      %v292 = vmax.f32 %v244, %v256
      %v293 = vmax.f32 %v245, %v263
      %v294 = vmul.f32 %v156, 0.5
      %v295 = vmul.f32 %v157, 0.5
      %v296 = vsub.s32 %v290, 4
      %v297 = vsub.s32 %v291, 4
      %v298 = vcvt.s32.f32 %v296
      %v299 = vcvt.s32.f32 %v297
      %v302 = vrot.slane %v294, 2
      %v303 = vrot.slane %v295, 2
      %v306 = vsub.f32 %v156, %v302
      %v307 = vsub.f32 %v157, %v303
      %v308 = vadd.f32 %v156, %v302
      %v309 = vadd.f32 %v157, %v303
      %v312 = vrot.slane %v308, 6
      %v313 = vrot.slane %v309, 6
      %vm316 = vcmask 1041408
      %v317 = vsel %vm316, %v306, %v312
      %v318 = vsel %vm316, %v307, %v313
      %v319 = vsel %vm249, %v317, %v292
      %v320 = vsel %vm249, %v318, %v293
      %vm321 = vcmask 1044480
      %v322 = vsel %vm321, %v319, %v298
      %v323 = vsel %vm321, %v320, %v299
      %324 = vst [vmem:[%s154] sm:$0x3f] %v322
      %325 = vst [vmem:[%s154 + $0x8] sm:$0x3f] %v323
      %s326 = smul.u32 2, %s17
      %p327 = scmp.lt.s32.totalorder %s16, 1
      %s328 = scalar_select %p327, %s16, 1
      %p329 = scmp.lt.s32.totalorder %s326, 1
      %s330 = scalar_select %p329, %s326, 1
      %s331 = smul.addr %s328, 2
      %s332 = sadd.s32 %s330, %s331
      %s333 = smul.addr %s332, 8
      %s334 = scalar_lea.vmem %s1, %s333
      // Predicated region
      $region25: #{tpu_custom_call.1} parent=23 // pred_check
        %p335 = pneg %p72
      $region26: #{tpu_custom_call.1} parent=23 // pred_check_branch
        %337 = sbr.rel (%p335) target = $region28
      $region27: #{tpu_custom_call.1} parent=23 // pred_region
        %s338 = smul.u32 2, %s17
      $region28: #{tpu_custom_call.1} parent=23 // pred_fallthru
        _
    $region24: #{tpu_custom_call.1} parent=5 // pred_fallthru
      _
    %p339 = scmp.le.s32.totalorder 2, %s7
    // Predicated region
    $region29: #{tpu_custom_call.1} parent=5 // pred_check
      %p340 = pneg %p339
    $region30: #{tpu_custom_call.1} parent=5 // pred_check_branch
      %342 = sbr.rel (%p340) target = $region32
    $region31: #{tpu_custom_call.1} parent=5 // pred_region
      %s343 = ssub.s32 %s7, 2
      // Predicated region
      $region33: #{tpu_custom_call.1} parent=31 // pred_check
        %p344 = pneg %p78
      $region34: #{tpu_custom_call.1} parent=31 // pred_check_branch
        %346 = sbr.rel (%p344) target = $region36
      $region35: #{tpu_custom_call.1} parent=31 // pred_region
        %s347 = smul.u32 2, %s19
        %p348 = scmp.lt.s32.totalorder %s18, 1
        %s349 = scalar_select %p348, %s18, 1
        %p350 = scmp.lt.s32.totalorder %s347, 1
        %s351 = scalar_select %p350, %s347, 1
        %s352 = smul.addr %s349, 2
        %s353 = sadd.s32 %s351, %s352
        %s354 = smul.addr %s353, 8
        %s355 = scalar_lea.vmem %s1, %s354
      $region36: #{tpu_custom_call.1} parent=31 // pred_fallthru
        _
    $region32: #{tpu_custom_call.1} parent=5 // pred_fallthru
      _
  $region6: #{tpu_custom_call.1} parent=0 // loop_footer
    %s11 = sadd.s32 1, %s7
  $region7: #{tpu_custom_call.1} parent=0 // loop_footer_branch
    %6 = sbr.rel target = $region3
  $region8: #{tpu_custom_call.1} parent=0 // loop_exit
    _

</llo_original>
